<compile_context>
chip_gen: v7x
topology: tpu7x:2x2x1
jax: 0.10.0
libtpu: 0.0.40
codegen_flags: <defaults>
</compile_context>

<pallas_src>
import jax
import jax.numpy as jnp
from jax.experimental import pallas as pl
from jax.experimental.pallas import tpu as pltpu

_LANE = 128


def _residual_relu_kernel(x_ref, o_ref):
    # Identity blocks + identity shortcut: out = relu(x + x). Pure VPU work,
    # fully hidden under the HBM<->VMEM DMA pipeline.
    x = x_ref[...]
    o_ref[...] = jnp.maximum(x + x, 0)


def _choose_cols(total):
    """Pick a lane-dense last dim that exactly divides `total` (no padding)."""
    # Wider is better: long unmasked vst streams, fewer rows to bookkeep.
    for cand in (16384, 8192, 4096, 2048, 1024, 512, 256, 128):
        if total % cand == 0:
            return cand
    # Hardened fallback (total not a multiple of 128): largest divisor of
    # `total` <= 16384, preferring multiples of 8, so lane occupancy stays
    # reasonable and the lane-padded VMEM footprint stays predictable.
    # TODO(synk): a multiple-of-128 bulk + tiny tail split would make even this
    # path fully unmasked; not needed for the shapes exercised here.
    limit = min(total, 16384)
    for cand in range(limit - (limit % 8), 7, -8):
        if total % cand == 0:
            return cand
    for cand in range(limit, 0, -1):
        if total % cand == 0:
            return cand
    return 1  # unreachable: 1 always divides


def residual_block_forward(x, in_channels, out_channels, activation="relu"):
    """Pallas implementation of ResidualBlock.forward (Identity blocks/shortcut)."""
    assert activation == "relu", "only 'relu' activation wired up here"
    # Identity-shortcut path of the PyTorch module (in_channels == out_channels).
    assert x.shape[1] == in_channels == out_channels

    orig_shape = x.shape
    total = x.size
    dtype = x.dtype
    itemsize = jnp.dtype(dtype).itemsize

    cols = _choose_cols(total)
    rows = total // cols
    x2d = x.reshape(rows, cols)  # metadata-only reshape, no extra HBM traffic

    # --- block sizing -----------------------------------------------------
    # Footprint is computed against the *lane-padded* width so narrow/odd cols
    # can't silently blow the scoped-VMEM budget.
    padded_cols = -(-cols // _LANE) * _LANE
    row_bytes = padded_cols * itemsize
    sublane = {4: 8, 2: 16, 1: 32}.get(itemsize, 8)

    # ~4 MiB blocks: re-amortizes the ~0.35 us per-grid-step overhead against
    # v7x's ~3.2 TB/s HBM while staying at the measured v6e roofline plateau;
    # double-buffered in+out working set is 16 MiB, well inside 64 MiB VMEM.
    target_block_bytes = 4 * 1024 * 1024
    single_block_bytes = 1 * 1024 * 1024  # genuinely small input: one DMA

    if rows * row_bytes <= single_block_bytes:
        # Small-input fast path: whole slab in one block / one grid step.
        tile_rows = rows
    else:
        tile_rows = max(1, target_block_bytes // row_bytes)
        # Force >= 4 programs so both v7x TensorCores get work on this
        # "parallel" axis (and the pipeline has steps to overlap).
        tile_rows = min(tile_rows, pl.cdiv(rows, 4))
        if tile_rows >= sublane:
            tile_rows -= tile_rows % sublane  # legal (8,128)-tiled block shape
        else:
            tile_rows = min(rows, sublane)  # == rows (full dim) or == sublane

    grid = (pl.cdiv(rows, tile_rows),)  # ragged edge block handled by Pallas

    # Note: input_output_aliases is deliberately omitted — with a non-donated
    # entry parameter XLA would insert a defensive full copy, regressing this
    # bandwidth-bound op. Add it when embedded in a model with donated buffers.
    out2d = pl.pallas_call(
        _residual_relu_kernel,
        out_shape=jax.ShapeDtypeStruct((rows, cols), dtype),
        grid_spec=pltpu.PrefetchScalarGridSpec(
            num_scalar_prefetch=0,
            grid=grid,
            in_specs=[pl.BlockSpec((tile_rows, cols), lambda i: (i, 0))],
            out_specs=pl.BlockSpec((tile_rows, cols), lambda i: (i, 0)),
        ),
        compiler_params=pltpu.CompilerParams(
            dimension_semantics=("parallel",),
            # Covers 4 MiB blocks x (in+out) x double-buffering with headroom;
            # above v5e's 16 MiB default scoped limit, below v7x's 64 MiB
            # physical VMEM, trivially fine on v6e's 128 MiB.
            vmem_limit_bytes=48 * 1024 * 1024,
        ),
    )(x2d)

    return out2d.reshape(orig_shape)


if __name__ == "__main__":
    key = jax.random.PRNGKey(0)
    # ResidualBlock(4, 4, 'relu'): no learnable parameters (Identity blocks/shortcut).
    N, C, H, W = 2, 4, 16, 16  # NCHW, matching the PyTorch module
    x = jax.random.normal(key, (N, C, H, W), dtype=jnp.float32)

    out = residual_block_forward(x, in_channels=C, out_channels=C, activation="relu")
    out = jax.block_until_ready(out)

    # sanity check against pure-JAX reference: relu(x + x) == relu(2*x)
    ref = jnp.maximum(2.0 * x, 0.0)
    assert out.shape == x.shape
    assert jnp.allclose(out, ref, atol=1e-6), "mismatch vs reference"

    print("KERNEL_OK")
</pallas_src>

<mosaic_0001>
module attributes {stable_mosaic.version = 11 : i64} {
  func.func @_residual_relu_kernel(%arg0: i32, %arg1: memref<1x2048xf32, #tpu.memory_space<vmem>>, %arg2: memref<1x2048xf32, #tpu.memory_space<vmem>>) attributes {dimension_semantics = [#tpu.dimension_semantics<parallel>], iteration_bounds = array<i64: 1>, scalar_prefetch = 0 : i64, scratch_operands = 0 : i64, tpu.core_type = #tpu.core_type<tc>, window_params = [{transform_indices = @transform_0, window_bounds = array<i64: 1, 2048>}, {transform_indices = @transform_1, window_bounds = array<i64: 1, 2048>}]} {
    %c0 = arith.constant 0 : index
    %c0_0 = arith.constant 0 : index
    %0 = vector.load %arg1[%c0, %c0_0] : memref<1x2048xf32, #tpu.memory_space<vmem>>, vector<1x2048xf32>
    %1 = arith.addf %0, %0 : vector<1x2048xf32>
    %cst = arith.constant 0.000000e+00 : f32
    %2 = vector.broadcast %cst : f32 to vector<1x2048xf32>
    %3 = arith.maximumf %1, %2 : vector<1x2048xf32>
    %c0_1 = arith.constant 0 : index
    %c0_2 = arith.constant 0 : index
    %4 = vector.load %arg2[%c0_1, %c0_2] : memref<1x2048xf32, #tpu.memory_space<vmem>>, vector<1x2048xf32>
    tpu.vector_store %arg2[%c0_1, %c0_2], %3 {strides = array<i32>} : memref<1x2048xf32, #tpu.memory_space<vmem>>, vector<1x2048xf32>,
    return
  }
  func.func @transform_0(%arg0: i32) -> (i32, i32) {
    %c0_i32 = arith.constant 0 : i32
    %c0_i32_0 = arith.constant 0 : i32
    return %arg0, %c0_i32 : i32, i32
  }
  func.func @transform_1(%arg0: i32) -> (i32, i32) {
    %c0_i32 = arith.constant 0 : i32
    %c0_i32_0 = arith.constant 0 : i32
    return %arg0, %c0_i32 : i32, i32
  }
}

</mosaic_0001>

<llo_original>
// kernel: tpu_custom_call.1
$region0: #{tpu_custom_call.1}
  #allocation0 [shape = 'u32[]', space=smem, size = 0x4, offset = 0x4, fixed_abs, tag = 'smem constant byte address 0x4 - core index']
  #allocation1 [shape = 'u32[144,128]{1,0:T(1,128)}', space=vmem, size = 0x12000, scoped, tag = 'internal scratch']
  %s0 = inlined_call_operand.hbm [shape: f32[1,2048], index: 0, kind: input, shape index: {}]
  %s1 = inlined_call_operand.hbm [shape: f32[1,2048], index: 1, kind: output, shape index: {}]
  %s2 = sld [smem:[#allocation0]]
  $region18: #{tpu_custom_call.1} parent=0
    _
  %s4 = ssub.s32 1, %s2
  %s5 = scalar_select 0, %s4, %s2
  $region1: #{tpu_custom_call.1} parent=0
    #allocation2 [shape = 'u8[8192]{0}', space=vmem, size = 0x2000, scoped, tag = 'input window, operand 0, single buffered']
    #allocation3 [shape = 's32[1]{0}', space=sflag, size = 0x4, scoped, tag = 'scoped memory for tpu_custom_call.1']
    #allocation4 [shape = 's32[1]{0}', space=sflag, size = 0x4, scoped, tag = 'scoped memory for tpu_custom_call.1']
    #allocation5 [shape = 'u8[8192]{0}', space=vmem, size = 0x2000, scoped, tag = 'output window, operand 0, single buffered']
    %6 = vsyncpa [#allocation3], 0
    %7 = vsyncpa [#allocation4], 0
    // Predicated region
    $region2: #{tpu_custom_call.1} parent=1 // pred_check
      _
    $region3: #{tpu_custom_call.1} parent=1 // pred_check_branch
      %9 = sbr.rel (0) target = $region5
    $region4: #{tpu_custom_call.1} parent=1 // pred_region
      %s11 = ssub.s32 256, 256
      %12 = vsyncadd [#allocation3], %s11
      %s14 = sshll.u32 [#allocation2], 4
      %s15 = int_to_ptr.vmem [resolvable:$true] %s14
      %17 = dma.hbm_to_vmem [thread:$0]  %s0, 256, %s15, [#allocation3]
    $region5: #{tpu_custom_call.1} parent=1 // pred_fallthru
      _
    // Predicated region
    $region6: #{tpu_custom_call.1} parent=1 // pred_check
      _
    $region7: #{tpu_custom_call.1} parent=1 // pred_check_branch
      %19 = sbr.rel (0) target = $region9
    $region8: #{tpu_custom_call.1} parent=1 // pred_region
      %20 = dma.done [#allocation3], 256
    $region9: #{tpu_custom_call.1} parent=1 // pred_fallthru
      _
    %v21 = vld [vmem:[#allocation2] sm:$0xff]
    %v22 = vld [vmem:[#allocation2 + $0x8] sm:$0xff]
    %v23 = vadd.f32 %v21, %v21
    %v24 = vadd.f32 %v22, %v22
    %v25 = vmax.f32 %v23, 0.0
    %v26 = vmax.f32 %v24, 0.0
    %27 = vst [vmem:[#allocation5] sm:$0xff] %v25
    %28 = vst [vmem:[#allocation5 + $0x8] sm:$0xff] %v26
    // Predicated region
    $region10: #{tpu_custom_call.1} parent=1 // pred_check
      _
    $region11: #{tpu_custom_call.1} parent=1 // pred_check_branch
      %30 = sbr.rel (0) target = $region13
    $region12: #{tpu_custom_call.1} parent=1 // pred_region
      %s32 = ssub.s32 256, 256
      %33 = vsyncadd [#allocation4], %s32
      %s35 = sshll.u32 [#allocation5], 4
      %s36 = int_to_ptr.vmem [resolvable:$true] %s35
      %38 = dma.vmem_to_hbm [thread:$0]  %s36, 256, %s1, [#allocation4]
    $region13: #{tpu_custom_call.1} parent=1 // pred_fallthru
      _
    // Predicated region
    $region14: #{tpu_custom_call.1} parent=1 // pred_check
      _
    $region15: #{tpu_custom_call.1} parent=1 // pred_check_branch
      %40 = sbr.rel (0) target = $region17
    $region16: #{tpu_custom_call.1} parent=1 // pred_region
      %41 = dma.done [#allocation4], 256
    $region17: #{tpu_custom_call.1} parent=1 // pred_fallthru
      _
    %42 = vsyncpa [#allocation3], 1
    %43 = vsyncpa [#allocation4], 1

</llo_original>
